<compile_context>
chip_gen: v7x
topology: tpu7x:2x2x1
jax: 0.10.0
libtpu: 0.0.40
codegen_flags: <defaults>
</compile_context>

<pallas_src>
import numpy as np

import jax
import jax.numpy as jnp
from jax import lax
from jax.experimental import pallas as pl
from jax.experimental.pallas import tpu as pltpu


def _brain_kernel(x_ref, wc_ref, w1_ref, b1_ref, w2_ref, b2_ref, out_ref):
    """One batch tile of the full forward pass.

    x_ref   : (n_tile, Kp)  bf16  batch-major flattened boards (+bias column)
    wc_ref  : (HW*8, Kp)    bf16  conv folded to a Toeplitz matrix, bias col
    w1_ref  : (8, HW*8)     f32   lin1 weight, columns ordered (p, o)
    b1_ref  : (8, 1)        f32   lin1 bias
    w2_ref  : (8, 1)        f32   lin2 weight as a column
    b2_ref  : (1, 1)        f32   lin2 bias (SMEM scalar)
    out_ref : (1, n_tile)   f32   lane-dense scores (batch on lanes)
    """
    # Conv2d(3->8, k=3, pad=1) + bias as one MXU matmul: (HW*8,Kp) x (Kp,n_tile).
    # dot_general contracts the shared last axis; the x-tile relayout happens
    # on-chip (XLU slot) instead of a wrapper-side HBM transpose.
    a = lax.dot_general(wc_ref[...], x_ref[...],
                        dimension_numbers=(((1,), (1,)), ((), ())),
                        preferred_element_type=jnp.float32)
    a = jnp.maximum(a, 0.0)                                    # (HW*8, n_tile)

    # Linear(HW*8 -> 8) + ReLU, K = HW*8.
    h = jnp.dot(w1_ref[...], a,
                preferred_element_type=jnp.float32) + b1_ref[...]
    h = jnp.maximum(h, 0.0)                                    # (8, n_tile)

    # Linear(8 -> 1): VPU multiply + sublane (XLU) reduction, written straight
    # into the lane-dense (1, n_tile) output row; scalar bias from SMEM.
    out_ref[...] = (jnp.sum(h * w2_ref[...], axis=0, keepdims=True)
                    + b2_ref[0, 0])


def brain_forward(board, params, board_size, *, n_tile=512):
    """board: (N, 3, H, W) float32 (NCHW, PyTorch convention) -> (N, 1)."""
    conv_w, conv_b, lin1_w, lin1_b, lin2_w, lin2_b = params
    H, W = board_size
    N, C = board.shape[0], board.shape[1]
    HW = H * W
    CHW = C * HW
    O = conv_w.shape[0]                     # 8 conv output channels
    K = lin1_w.shape[0]                     # 8 hidden units
    Kp = ((CHW + 1 + 7) // 8) * 8           # feature dim padded: 27+1 -> 32

    n_pad = ((N + n_tile - 1) // n_tile) * n_tile
    num_blocks = n_pad // n_tile            # large N -> >=2 parallel steps (v7x)

    # ---- data glue: batch-major, single pad pass, no transpose ----
    # Pad value 1.0: column CHW becomes the constant-1 feature that carries the
    # conv bias; columns CHW+1.. hit zero weight columns; padded batch rows are
    # sliced away after the kernel.
    x = board.reshape(N, CHW)                                   # free view
    x = jnp.pad(x, ((0, n_pad - N), (0, Kp - CHW)), constant_values=1.0)
    x = x.astype(jnp.bfloat16)                                  # (n_pad, Kp)

    # ---- weight repack (once per call, parameters only) ----
    # Static 0/1 placement tensor S[p, k, q]: conv output position p reads
    # input position q through tap k (zero padding drops out-of-range taps).
    S = np.zeros((HW, 9, HW), np.float32)
    for h in range(H):
        for w in range(W):
            for ki in range(3):
                for kj in range(3):
                    hi, wj = h + ki - 1, w + kj - 1
                    if 0 <= hi < H and 0 <= wj < W:
                        S[h * W + w, ki * 3 + kj, hi * W + wj] = 1.0
    # wconv[(p*O + o), (c*HW + q)] = sum_k conv_w[o, c, k] * S[p, k, q]
    wconv = jnp.einsum("ock,pkq->pocq", conv_w.reshape(O, C, 9),
                       jnp.asarray(S)).reshape(HW * O, CHW)
    bias_col = jnp.tile(conv_b, HW).reshape(HW * O, 1)   # row p*O+o -> conv_b[o]
    wconv = jnp.concatenate(
        [wconv, bias_col, jnp.zeros((HW * O, Kp - CHW - 1), jnp.float32)],
        axis=1).astype(jnp.bfloat16)                      # (HW*O, Kp)

    # PyTorch flatten of (N, 8, H, W) is feature f = o*HW + p; our `a` rows are
    # p*O + o, so reorder lin1 columns accordingly.
    w1 = lin1_w.reshape(K, O, HW).transpose(0, 2, 1).reshape(K, HW * O)
    b1 = lin1_b.reshape(K, 1)
    w2 = lin2_w.reshape(K, 1)
    b2 = lin2_b.reshape(1, 1)

    out = pl.pallas_call(
        _brain_kernel,
        out_shape=jax.ShapeDtypeStruct((1, n_pad), jnp.float32),
        grid=(num_blocks,),
        in_specs=[
            pl.BlockSpec((n_tile, Kp), lambda i: (i, 0)),
            pl.BlockSpec((HW * O, Kp), lambda i: (0, 0)),
            pl.BlockSpec((K, HW * O), lambda i: (0, 0)),
            pl.BlockSpec((K, 1), lambda i: (0, 0)),
            pl.BlockSpec((K, 1), lambda i: (0, 0)),
            pl.BlockSpec(memory_space=pltpu.MemorySpace.SMEM),
        ],
        out_specs=pl.BlockSpec((1, n_tile), lambda i: (0, i)),
        compiler_params=pltpu.CompilerParams(
            dimension_semantics=("parallel",)),
    )(x, wconv, w1, b1, w2, b2)

    return out[0, :N].reshape(N, 1)


def brain_reference(board, params):
    """Pure-JAX reference of the PyTorch forward (for verification)."""
    conv_w, conv_b, lin1_w, lin1_b, lin2_w, lin2_b = params
    y = lax.conv_general_dilated(
        board, conv_w, window_strides=(1, 1), padding=((1, 1), (1, 1)),
        dimension_numbers=("NCHW", "OIHW", "NCHW"))
    y = jax.nn.relu(y + conv_b[None, :, None, None])
    flat = y.reshape(y.shape[0], -1)                      # (N, 8*H*W), (o,h,w)
    h = jax.nn.relu(flat @ lin1_w.T + lin1_b)
    return h @ lin2_w.T + lin2_b


def make_params(key, board_size):
    H, W = board_size
    keys = jax.random.split(key, 6)
    fan_c = 3 * 3 * 3
    fan_1 = H * W * 8
    fan_2 = 8
    conv_w = jax.random.uniform(keys[0], (8, 3, 3, 3), jnp.float32,
                                -1.0 / fan_c ** 0.5, 1.0 / fan_c ** 0.5)
    conv_b = jax.random.uniform(keys[1], (8,), jnp.float32,
                                -1.0 / fan_c ** 0.5, 1.0 / fan_c ** 0.5)
    lin1_w = jax.random.uniform(keys[2], (8, fan_1), jnp.float32,
                                -1.0 / fan_1 ** 0.5, 1.0 / fan_1 ** 0.5)
    lin1_b = jax.random.uniform(keys[3], (8,), jnp.float32,
                                -1.0 / fan_1 ** 0.5, 1.0 / fan_1 ** 0.5)
    lin2_w = jax.random.uniform(keys[4], (1, 8), jnp.float32,
                                -1.0 / fan_2 ** 0.5, 1.0 / fan_2 ** 0.5)
    lin2_b = jax.random.uniform(keys[5], (1,), jnp.float32,
                                -1.0 / fan_2 ** 0.5, 1.0 / fan_2 ** 0.5)
    return conv_w, conv_b, lin1_w, lin1_b, lin2_w, lin2_b


if __name__ == "__main__":
    board_size = (3, 3)          # tic-tac-toe board
    batch = 2

    key = jax.random.PRNGKey(0)
    k_board, k_params = jax.random.split(key)
    board = jax.random.normal(
        k_board, (batch, 3, board_size[0], board_size[1]), jnp.float32)
    params = make_params(k_params, board_size)

    out = jax.block_until_ready(brain_forward(board, params, board_size))
    ref = jax.block_until_ready(brain_reference(board, params))

    assert out.shape == (batch, 1), out.shape
    # bf16 x / conv-matrix narrowing -> relaxed tolerance vs the f32 reference.
    assert jnp.allclose(out, ref, atol=1e-2, rtol=1e-2), (out, ref)

    print("KERNEL_OK")
</pallas_src>

<mosaic_0001>
module attributes {stable_mosaic.version = 11 : i64} {
  func.func @_brain_kernel(%arg0: i32, %arg1: memref<512x32xbf16, #tpu.memory_space<vmem>>, %arg2: memref<72x32xbf16, #tpu.memory_space<vmem>>, %arg3: memref<8x72xf32, #tpu.memory_space<vmem>>, %arg4: memref<8x1xf32, #tpu.memory_space<vmem>>, %arg5: memref<8x1xf32, #tpu.memory_space<vmem>>, %arg6: memref<1x1xf32, #tpu.memory_space<smem>>, %arg7: memref<1x512xf32, #tpu.memory_space<vmem>>) attributes {dimension_semantics = [#tpu.dimension_semantics<parallel>], iteration_bounds = array<i64: 1>, scalar_prefetch = 0 : i64, scratch_operands = 0 : i64, tpu.core_type = #tpu.core_type<tc>, window_params = [{transform_indices = @transform_0, window_bounds = array<i64: 512, 32>}, {pipeline_mode = #tpu.pipeline_mode<synchronous>, transform_indices = @transform_1, window_bounds = array<i64: 72, 32>}, {pipeline_mode = #tpu.pipeline_mode<synchronous>, transform_indices = @transform_2, window_bounds = array<i64: 8, 72>}, {pipeline_mode = #tpu.pipeline_mode<synchronous>, transform_indices = @transform_3, window_bounds = array<i64: 8, 1>}, {pipeline_mode = #tpu.pipeline_mode<synchronous>, transform_indices = @transform_4, window_bounds = array<i64: 8, 1>}, {transform_indices = @transform_5, window_bounds = array<i64: 1, 1>}, {transform_indices = @transform_6, window_bounds = array<i64: 1, 512>}]} {
    %c0 = arith.constant 0 : index
    %c0_0 = arith.constant 0 : index
    %0 = vector.load %arg2[%c0, %c0_0] : memref<72x32xbf16, #tpu.memory_space<vmem>>, vector<72x32xbf16>
    %c0_1 = arith.constant 0 : index
    %c0_2 = arith.constant 0 : index
    %1 = vector.load %arg1[%c0_1, %c0_2] : memref<512x32xbf16, #tpu.memory_space<vmem>>, vector<512x32xbf16>
    %cst = arith.constant dense<0.000000e+00> : vector<72x512xf32>
    %2 = tpu.matmul %0, %1, %cst {dimension_numbers = #tpu.dot_dimension_numbers<[1], [1], [0], [0], [0, 0, 1, 0], [], []>} : vector<72x32xbf16>, vector<512x32xbf16>, vector<72x512xf32> -> vector<72x512xf32>
    %cst_3 = arith.constant 0.000000e+00 : f32
    %3 = vector.broadcast %cst_3 : f32 to vector<72x512xf32>
    %4 = arith.maximumf %2, %3 : vector<72x512xf32>
    %c0_4 = arith.constant 0 : index
    %c0_5 = arith.constant 0 : index
    %5 = vector.load %arg3[%c0_4, %c0_5] : memref<8x72xf32, #tpu.memory_space<vmem>>, vector<8x72xf32>
    %cst_6 = arith.constant dense<0.000000e+00> : vector<8x512xf32>
    %6 = tpu.matmul %5, %4, %cst_6 {dimension_numbers = #tpu.dot_dimension_numbers<[1], [0], [0], [1], [0, 0, 1, 1], [], []>} : vector<8x72xf32>, vector<72x512xf32>, vector<8x512xf32> -> vector<8x512xf32>
    %c0_7 = arith.constant 0 : index
    %c0_8 = arith.constant 0 : index
    %7 = vector.load %arg4[%c0_7, %c0_8] : memref<8x1xf32, #tpu.memory_space<vmem>>, vector<8x1xf32>
    %8 = vector.broadcast %7 : vector<8x1xf32> to vector<8x512xf32>
    %9 = arith.addf %6, %8 : vector<8x512xf32>
    %cst_9 = arith.constant 0.000000e+00 : f32
    %10 = vector.broadcast %cst_9 : f32 to vector<8x512xf32>
    %11 = arith.maximumf %9, %10 : vector<8x512xf32>
    %c0_10 = arith.constant 0 : index
    %c0_11 = arith.constant 0 : index
    %12 = vector.load %arg5[%c0_10, %c0_11] : memref<8x1xf32, #tpu.memory_space<vmem>>, vector<8x1xf32>
    %13 = vector.broadcast %12 : vector<8x1xf32> to vector<8x512xf32>
    %14 = arith.mulf %11, %13 : vector<8x512xf32>
    %cst_12 = arith.constant dense<0.000000e+00> : vector<512xf32>
    %15 = vector.multi_reduction <add>, %14, %cst_12 [0] : vector<8x512xf32> to vector<512xf32>
    %16 = vector.shape_cast %15 : vector<512xf32> to vector<1x512xf32>
    %c0_13 = arith.constant 0 : index
    %c0_14 = arith.constant 0 : index
    %17 = memref.load %arg6[%c0_13, %c0_14] : memref<1x1xf32, #tpu.memory_space<smem>>
    %18 = vector.broadcast %17 : f32 to vector<1x512xf32>
    %19 = arith.addf %16, %18 : vector<1x512xf32>
    %c0_15 = arith.constant 0 : index
    %c0_16 = arith.constant 0 : index
    %20 = vector.load %arg7[%c0_15, %c0_16] : memref<1x512xf32, #tpu.memory_space<vmem>>, vector<1x512xf32>
    tpu.vector_store %arg7[%c0_15, %c0_16], %19 {strides = array<i32>} : memref<1x512xf32, #tpu.memory_space<vmem>>, vector<1x512xf32>,
    return
  }
  func.func @transform_0(%arg0: i32) -> (i32, i32) {
    %c0_i32 = arith.constant 0 : i32
    %c0_i32_0 = arith.constant 0 : i32
    return %arg0, %c0_i32 : i32, i32
  }
  func.func @transform_1(%arg0: i32) -> (i32, i32) {
    %c0_i32 = arith.constant 0 : i32
    %c0_i32_0 = arith.constant 0 : i32
    %c0_i32_1 = arith.constant 0 : i32
    return %c0_i32, %c0_i32_0 : i32, i32
  }
  func.func @transform_2(%arg0: i32) -> (i32, i32) {
    %c0_i32 = arith.constant 0 : i32
    %c0_i32_0 = arith.constant 0 : i32
    %c0_i32_1 = arith.constant 0 : i32
    return %c0_i32, %c0_i32_0 : i32, i32
  }
  func.func @transform_3(%arg0: i32) -> (i32, i32) {
    %c0_i32 = arith.constant 0 : i32
    %c0_i32_0 = arith.constant 0 : i32
    %c0_i32_1 = arith.constant 0 : i32
    return %c0_i32, %c0_i32_0 : i32, i32
  }
  func.func @transform_4(%arg0: i32) -> (i32, i32) {
    %c0_i32 = arith.constant 0 : i32
    %c0_i32_0 = arith.constant 0 : i32
    %c0_i32_1 = arith.constant 0 : i32
    return %c0_i32, %c0_i32_0 : i32, i32
  }
  func.func @transform_5(%arg0: i32) -> (i32, i32) {
    %c0_i32 = arith.constant 0 : i32
    %c0_i32_0 = arith.constant 0 : i32
    %c0_i32_1 = arith.constant 0 : i32
    return %c0_i32, %c0_i32_0 : i32, i32
  }
  func.func @transform_6(%arg0: i32) -> (i32, i32) {
    %c0_i32 = arith.constant 0 : i32
    %c0_i32_0 = arith.constant 0 : i32
    return %c0_i32, %arg0 : i32, i32
  }
}

</mosaic_0001>

<llo_original>
// kernel: tpu_custom_call.1
$region0: #{tpu_custom_call.1}
  #allocation0 [shape = 'u32[]', space=smem, size = 0x4, offset = 0x4, fixed_abs, tag = 'smem constant byte address 0x4 - core index']
  #allocation1 [shape = 'u32[144,128]{1,0:T(1,128)}', space=vmem, size = 0x12000, scoped, tag = 'internal scratch']
  #allocation2 [shape = 'f32[1,1]{1,0:T(1,128)S(6)}', space=smem, size = 0x200, scoped, tag = 'scoped memory for tpu_custom_call.1']
  %s0 = inlined_call_operand.vmem [shape: bf16[512,32], index: 0, kind: input, shape index: {}]
  %s1 = inlined_call_operand.vmem [shape: bf16[72,32], index: 1, kind: input, shape index: {}]
  %s2 = inlined_call_operand.vmem [shape: f32[8,72], index: 2, kind: input, shape index: {}]
  %s3 = inlined_call_operand.vmem [shape: f32[8,1], index: 3, kind: input, shape index: {}]
  %s4 = inlined_call_operand.vmem [shape: f32[8,1], index: 4, kind: input, shape index: {}]
  %s5 = inlined_call_operand.<no memory space> [shape: f32[1,1], index: 5, kind: input, shape index: {}]
  %s6 = inlined_call_operand.hbm [shape: f32[1,512], index: 6, kind: output, shape index: {}]
  %s7 = sld [smem:[#allocation0]]
  $region34: #{tpu_custom_call.1} parent=0
    _
  %s9 = ssub.s32 1, %s7
  %s10 = scalar_select 0, %s9, %s7
  %11 = sst [smem:[#allocation2]] %s5
  $region1: #{tpu_custom_call.1} parent=0
    #allocation3 [shape = 'u8[2048]{0}', space=vmem, size = 0x800, scoped, tag = 'output window, operand 0, single buffered']
    #allocation4 [shape = 's32[1]{0}', space=sflag, size = 0x4, scoped, tag = 'scoped memory for tpu_custom_call.1']
    %12 = vsyncpa [#allocation4], 0
    // Predicated region
    $region2: #{tpu_custom_call.1} parent=1 // pred_check
      _
    $region3: #{tpu_custom_call.1} parent=1 // pred_check_branch
      %14 = sbr.rel (0) target = $region5
    $region4: #{tpu_custom_call.1} parent=1 // pred_region
      _
    $region5: #{tpu_custom_call.1} parent=1 // pred_fallthru
      _
    // Predicated region
    $region6: #{tpu_custom_call.1} parent=1 // pred_check
      _
    $region7: #{tpu_custom_call.1} parent=1 // pred_check_branch
      %16 = sbr.rel (0) target = $region9
    $region8: #{tpu_custom_call.1} parent=1 // pred_region
      _
    $region9: #{tpu_custom_call.1} parent=1 // pred_fallthru
      _
    // Predicated region
    $region10: #{tpu_custom_call.1} parent=1 // pred_check
      _
    $region11: #{tpu_custom_call.1} parent=1 // pred_check_branch
      %18 = sbr.rel (0) target = $region13
    $region12: #{tpu_custom_call.1} parent=1 // pred_region
      _
    $region13: #{tpu_custom_call.1} parent=1 // pred_fallthru
      _
    // Predicated region
    $region14: #{tpu_custom_call.1} parent=1 // pred_check
      _
    $region15: #{tpu_custom_call.1} parent=1 // pred_check_branch
      %20 = sbr.rel (0) target = $region17
    $region16: #{tpu_custom_call.1} parent=1 // pred_region
      _
    $region17: #{tpu_custom_call.1} parent=1 // pred_fallthru
      _
    // Predicated region
    $region18: #{tpu_custom_call.1} parent=1 // pred_check
      _
    $region19: #{tpu_custom_call.1} parent=1 // pred_check_branch
      %22 = sbr.rel (0) target = $region21
    $region20: #{tpu_custom_call.1} parent=1 // pred_region
      _
    $region21: #{tpu_custom_call.1} parent=1 // pred_fallthru
      _
    // Predicated region
    $region22: #{tpu_custom_call.1} parent=1 // pred_check
      _
    $region23: #{tpu_custom_call.1} parent=1 // pred_check_branch
      %24 = sbr.rel (0) target = $region25
    $region24: #{tpu_custom_call.1} parent=1 // pred_region
      _
    $region25: #{tpu_custom_call.1} parent=1 // pred_fallthru
      _
    %v26 = vld [vmem:[%s1] sm:$0xf]
    %v27 = vld [vmem:[%s1 + $0x4] sm:$0xf]
    %v28 = vld [vmem:[%s1 + $0x8] sm:$0xf]
    %v29 = vld [vmem:[%s1 + $0xc] sm:$0xf]
    %v30 = vld [vmem:[%s1 + $0x10] sm:$0xf]
    %v31 = vld [vmem:[%s1 + $0x14] sm:$0xf]
    %v32 = vld [vmem:[%s1 + $0x18] sm:$0xf]
    %v33 = vld [vmem:[%s1 + $0x1c] sm:$0xf]
    %v34 = vld [vmem:[%s1 + $0x20] sm:$0xf]
    %v35 = vld [vmem:[%s0] sm:$0xf]
    %v36 = vld [vmem:[%s0 + $0x4] sm:$0xf]
    %v37 = vld [vmem:[%s0 + $0x8] sm:$0xf]
    %v38 = vld [vmem:[%s0 + $0xc] sm:$0xf]
    %v39 = vld [vmem:[%s0 + $0x10] sm:$0xf]
    %v40 = vld [vmem:[%s0 + $0x14] sm:$0xf]
    %v41 = vld [vmem:[%s0 + $0x18] sm:$0xf]
    %v42 = vld [vmem:[%s0 + $0x1c] sm:$0xf]
    %v43 = vld [vmem:[%s0 + $0x20] sm:$0xf]
    %v44 = vld [vmem:[%s0 + $0x24] sm:$0xf]
    %v45 = vld [vmem:[%s0 + $0x28] sm:$0xf]
    %v46 = vld [vmem:[%s0 + $0x2c] sm:$0xf]
    %v47 = vld [vmem:[%s0 + $0x30] sm:$0xf]
    %v48 = vld [vmem:[%s0 + $0x34] sm:$0xf]
    %v49 = vld [vmem:[%s0 + $0x38] sm:$0xf]
    %v50 = vld [vmem:[%s0 + $0x3c] sm:$0xf]
    %v51 = vld [vmem:[%s0 + $0x40] sm:$0xf]
    %v52 = vld [vmem:[%s0 + $0x44] sm:$0xf]
    %v53 = vld [vmem:[%s0 + $0x48] sm:$0xf]
    %v54 = vld [vmem:[%s0 + $0x4c] sm:$0xf]
    %v55 = vld [vmem:[%s0 + $0x50] sm:$0xf]
    %v56 = vld [vmem:[%s0 + $0x54] sm:$0xf]
    %v57 = vld [vmem:[%s0 + $0x58] sm:$0xf]
    %v58 = vld [vmem:[%s0 + $0x5c] sm:$0xf]
    %v59 = vld [vmem:[%s0 + $0x60] sm:$0xf]
    %v60 = vld [vmem:[%s0 + $0x64] sm:$0xf]
    %v61 = vld [vmem:[%s0 + $0x68] sm:$0xf]
    %v62 = vld [vmem:[%s0 + $0x6c] sm:$0xf]
    %v63 = vld [vmem:[%s0 + $0x70] sm:$0xf]
    %v64 = vld [vmem:[%s0 + $0x74] sm:$0xf]
    %v65 = vld [vmem:[%s0 + $0x78] sm:$0xf]
    %v66 = vld [vmem:[%s0 + $0x7c] sm:$0xf]
    %v67 = vld [vmem:[%s0 + $0x80] sm:$0xf]
    %v68 = vld [vmem:[%s0 + $0x84] sm:$0xf]
    %v69 = vld [vmem:[%s0 + $0x88] sm:$0xf]
    %v70 = vld [vmem:[%s0 + $0x8c] sm:$0xf]
    %v71 = vld [vmem:[%s0 + $0x90] sm:$0xf]
    %v72 = vld [vmem:[%s0 + $0x94] sm:$0xf]
    %v73 = vld [vmem:[%s0 + $0x98] sm:$0xf]
    %v74 = vld [vmem:[%s0 + $0x9c] sm:$0xf]
    %v75 = vld [vmem:[%s0 + $0xa0] sm:$0xf]
    %v76 = vld [vmem:[%s0 + $0xa4] sm:$0xf]
    %v77 = vld [vmem:[%s0 + $0xa8] sm:$0xf]
    %v78 = vld [vmem:[%s0 + $0xac] sm:$0xf]
    %v79 = vld [vmem:[%s0 + $0xb0] sm:$0xf]
    %v80 = vld [vmem:[%s0 + $0xb4] sm:$0xf]
    %v81 = vld [vmem:[%s0 + $0xb8] sm:$0xf]
    %v82 = vld [vmem:[%s0 + $0xbc] sm:$0xf]
    %v83 = vld [vmem:[%s0 + $0xc0] sm:$0xf]
    %v84 = vld [vmem:[%s0 + $0xc4] sm:$0xf]
    %v85 = vld [vmem:[%s0 + $0xc8] sm:$0xf]
    %v86 = vld [vmem:[%s0 + $0xcc] sm:$0xf]
    %v87 = vld [vmem:[%s0 + $0xd0] sm:$0xf]
    %v88 = vld [vmem:[%s0 + $0xd4] sm:$0xf]
    %v89 = vld [vmem:[%s0 + $0xd8] sm:$0xf]
    %v90 = vld [vmem:[%s0 + $0xdc] sm:$0xf]
    %v91 = vld [vmem:[%s0 + $0xe0] sm:$0xf]
    %v92 = vld [vmem:[%s0 + $0xe4] sm:$0xf]
    %v93 = vld [vmem:[%s0 + $0xe8] sm:$0xf]
    %v94 = vld [vmem:[%s0 + $0xec] sm:$0xf]
    %v95 = vld [vmem:[%s0 + $0xf0] sm:$0xf]
    %v96 = vld [vmem:[%s0 + $0xf4] sm:$0xf]
    %v97 = vld [vmem:[%s0 + $0xf8] sm:$0xf]
    %v98 = vld [vmem:[%s0 + $0xfc] sm:$0xf]
    %v108 = vunpack.c.l.b16 %v26
    %v109 = vunpack.c.l.b16 %v27
    %v110 = vunpack.c.l.b16 %v28
    %v111 = vunpack.c.l.b16 %v29
    %v112 = vunpack.c.l.b16 %v30
    %v113 = vunpack.c.l.b16 %v31
    %v114 = vunpack.c.l.b16 %v32
    %v115 = vunpack.c.l.b16 %v33
    %v116 = vunpack.c.l.b16 %v34
    %v117 = vpack.c.b16 %v109, %v108
    %v118 = vpack.c.b16 %v111, %v110
    %v119 = vpack.c.b16 %v113, %v112
    %v120 = vpack.c.b16 %v115, %v114
    %v121 = vpack.c.b16 %v116, %v116
    %v186 = vunpack.c.l.b16 %v35
    %v187 = vunpack.c.l.b16 %v36
    %v188 = vunpack.c.l.b16 %v37
    %v189 = vunpack.c.l.b16 %v38
    %v190 = vunpack.c.l.b16 %v39
    %v191 = vunpack.c.l.b16 %v40
    %v192 = vunpack.c.l.b16 %v41
    %v193 = vunpack.c.l.b16 %v42
    %v194 = vunpack.c.l.b16 %v43
    %v195 = vunpack.c.l.b16 %v44
    %v196 = vunpack.c.l.b16 %v45
    %v197 = vunpack.c.l.b16 %v46
    %v198 = vunpack.c.l.b16 %v47
    %v199 = vunpack.c.l.b16 %v48
    %v200 = vunpack.c.l.b16 %v49
    %v201 = vunpack.c.l.b16 %v50
    %v202 = vunpack.c.l.b16 %v51
    %v203 = vunpack.c.l.b16 %v52
    %v204 = vunpack.c.l.b16 %v53
    %v205 = vunpack.c.l.b16 %v54
    %v206 = vunpack.c.l.b16 %v55
    %v207 = vunpack.c.l.b16 %v56
    %v208 = vunpack.c.l.b16 %v57
    %v209 = vunpack.c.l.b16 %v58
    %v210 = vunpack.c.l.b16 %v59
    %v211 = vunpack.c.l.b16 %v60
    %v212 = vunpack.c.l.b16 %v61
    %v213 = vunpack.c.l.b16 %v62
    %v214 = vunpack.c.l.b16 %v63
    %v215 = vunpack.c.l.b16 %v64
    %v216 = vunpack.c.l.b16 %v65
    %v217 = vunpack.c.l.b16 %v66
    %v218 = vunpack.c.l.b16 %v67
    %v219 = vunpack.c.l.b16 %v68
    %v220 = vunpack.c.l.b16 %v69
    %v221 = vunpack.c.l.b16 %v70
    %v222 = vunpack.c.l.b16 %v71
    %v223 = vunpack.c.l.b16 %v72
    %v224 = vunpack.c.l.b16 %v73
    %v225 = vunpack.c.l.b16 %v74
    %v226 = vunpack.c.l.b16 %v75
    %v227 = vunpack.c.l.b16 %v76
    %v228 = vunpack.c.l.b16 %v77
    %v229 = vunpack.c.l.b16 %v78
    %v230 = vunpack.c.l.b16 %v79
    %v231 = vunpack.c.l.b16 %v80
    %v232 = vunpack.c.l.b16 %v81
    %v233 = vunpack.c.l.b16 %v82
    %v234 = vunpack.c.l.b16 %v83
    %v235 = vunpack.c.l.b16 %v84
    %v236 = vunpack.c.l.b16 %v85
    %v237 = vunpack.c.l.b16 %v86
    %v238 = vunpack.c.l.b16 %v87
    %v239 = vunpack.c.l.b16 %v88
    %v240 = vunpack.c.l.b16 %v89
    %v241 = vunpack.c.l.b16 %v90
    %v242 = vunpack.c.l.b16 %v91
    %v243 = vunpack.c.l.b16 %v92
    %v244 = vunpack.c.l.b16 %v93
    %v245 = vunpack.c.l.b16 %v94
    %v246 = vunpack.c.l.b16 %v95
    %v247 = vunpack.c.l.b16 %v96
    %v248 = vunpack.c.l.b16 %v97
    %v249 = vunpack.c.l.b16 %v98
    %v250 = vpack.c.b16 %v187, %v186
    %v251 = vpack.c.b16 %v189, %v188
    %v252 = vpack.c.b16 %v191, %v190
    %v253 = vpack.c.b16 %v193, %v192
    %v254 = vpack.c.b16 %v195, %v194
    %v255 = vpack.c.b16 %v197, %v196
    %v256 = vpack.c.b16 %v199, %v198
    %v257 = vpack.c.b16 %v201, %v200
    %v258 = vpack.c.b16 %v203, %v202
    %v259 = vpack.c.b16 %v205, %v204
    %v260 = vpack.c.b16 %v207, %v206
    %v261 = vpack.c.b16 %v209, %v208
    %v262 = vpack.c.b16 %v211, %v210
    %v263 = vpack.c.b16 %v213, %v212
    %v264 = vpack.c.b16 %v215, %v214
    %v265 = vpack.c.b16 %v217, %v216
    %v266 = vpack.c.b16 %v219, %v218
    %v267 = vpack.c.b16 %v221, %v220
    %v268 = vpack.c.b16 %v223, %v222
    %v269 = vpack.c.b16 %v225, %v224
    %v270 = vpack.c.b16 %v227, %v226
    %v271 = vpack.c.b16 %v229, %v228
    %v272 = vpack.c.b16 %v231, %v230
    %v273 = vpack.c.b16 %v233, %v232
    %v274 = vpack.c.b16 %v235, %v234
    %v275 = vpack.c.b16 %v237, %v236
    %v276 = vpack.c.b16 %v239, %v238
    %v277 = vpack.c.b16 %v241, %v240
    %v278 = vpack.c.b16 %v243, %v242
    %v279 = vpack.c.b16 %v245, %v244
    %v280 = vpack.c.b16 %v247, %v246
    %v281 = vpack.c.b16 %v249, %v248
    %vm282 = vcmask 261120
    %v284 = vsel %vm282, %v117, 0
    %v287 = vsel %vm282, %v118, 0
    %v290 = vsel %vm282, %v119, 0
    %v293 = vsel %vm282, %v120, 0
    %v296 = vsel %vm282, %v121, 0
    %v299 = vsel %vm282, %v250, 0
    %v302 = vsel %vm282, %v251, 0
    %v305 = vsel %vm282, %v252, 0
    %v308 = vsel %vm282, %v253, 0
    %v311 = vsel %vm282, %v254, 0
    %v314 = vsel %vm282, %v255, 0
    %v317 = vsel %vm282, %v256, 0
    %v320 = vsel %vm282, %v257, 0
    %v323 = vsel %vm282, %v258, 0
    %v326 = vsel %vm282, %v259, 0
    %v329 = vsel %vm282, %v260, 0
    %v332 = vsel %vm282, %v261, 0
    %v335 = vsel %vm282, %v262, 0
    %v338 = vsel %vm282, %v263, 0
    %v341 = vsel %vm282, %v264, 0
    %v344 = vsel %vm282, %v265, 0
    %v347 = vsel %vm282, %v266, 0
    %v350 = vsel %vm282, %v267, 0
    %v353 = vsel %vm282, %v268, 0
    %v356 = vsel %vm282, %v269, 0
    %v359 = vsel %vm282, %v270, 0
    %v362 = vsel %vm282, %v271, 0
    %v365 = vsel %vm282, %v272, 0
    %v368 = vsel %vm282, %v273, 0
    %v371 = vsel %vm282, %v274, 0
    %v374 = vsel %vm282, %v275, 0
    %v377 = vsel %vm282, %v276, 0
    %v380 = vsel %vm282, %v277, 0
    %v383 = vsel %vm282, %v278, 0
    %v386 = vsel %vm282, %v279, 0
    %v389 = vsel %vm282, %v280, 0
    %v392 = vsel %vm282, %v281, 0
    %394 = vmatprep.subr.bf16.mxu0 0
    %395 = vmatpush1.bf16.xpose.msra.mxu0 %v299
    %396 = vmatprep.subr.bf16.mxu0 0
    %397 = vmatpush1.bf16.xpose.msra.mxu0 %v302
    %398 = vmatprep.subr.bf16.mxu0 0
    %399 = vmatpush1.bf16.xpose.msra.mxu0 %v305
    %400 = vmatprep.subr.bf16.mxu0 0
    %401 = vmatpush1.bf16.xpose.msra.mxu0 %v308
    %402 = vmatprep.subr.bf16.mxu0 0
    %403 = vmatpush1.bf16.xpose.msra.mxu0 %v311
    %404 = vmatprep.subr.bf16.mxu0 0
    %405 = vmatpush1.bf16.xpose.msra.mxu0 %v314
    %406 = vmatprep.subr.bf16.mxu0 0
    %407 = vmatpush1.bf16.xpose.msra.mxu0 %v317
    %408 = vmatprep.subr.bf16.mxu0 0
    %409 = vmatpush1.bf16.xpose.msra.mxu0 %v320
    %410 = vmatprep.subr.bf16.mxu0 0
    %411 = vmatpush1.bf16.xpose.msra.mxu0 %v323
    %412 = vmatprep.subr.bf16.mxu0 0
    %413 = vmatpush1.bf16.xpose.msra.mxu0 %v326
    %414 = vmatprep.subr.bf16.mxu0 0
    %415 = vmatpush1.bf16.xpose.msra.mxu0 %v329
    %416 = vmatprep.subr.bf16.mxu0 0
    %417 = vmatpush1.bf16.xpose.msra.mxu0 %v332
    %418 = vmatprep.subr.bf16.mxu0 0
    %419 = vmatpush1.bf16.xpose.msra.mxu0 %v335
    %420 = vmatprep.subr.bf16.mxu0 0
    %421 = vmatpush1.bf16.xpose.msra.mxu0 %v338
    %422 = vmatprep.subr.bf16.mxu0 0
    %423 = vmatpush1.bf16.xpose.msra.mxu0 %v341
    %424 = vmatprep.subr.bf16.mxu0 0
    %425 = vmatpush1.bf16.xpose.msra.mxu0 %v344
    %426 = vmatprep.mubr.bf16.mxu0 0
    %427 = vmatmul.mubr.bf16.gmra.mrb[0].mxu0 %v284
    %v428 = vpop.f32.mrb[0].mxu0
    %v429 = vadd.f32 0.0, %v428
    %v430 = vpop.f32.mrb[0].mxu0
    %v431 = vadd.f32 0.0, %v430
    %v432 = vpop.f32.mrb[0].mxu0
    %v433 = vadd.f32 0.0, %v432
    %v434 = vpop.f32.mrb[0].mxu0
    %v435 = vadd.f32 0.0, %v434
    %436 = vmatprep.mubr.bf16.mxu0 0
    %437 = vmatmul.mubr.bf16.gmra.mrb[0].mxu0 %v287
    %v438 = vpop.f32.mrb[0].mxu0
    %v439 = vadd.f32 0.0, %v438
    %v440 = vpop.f32.mrb[0].mxu0
    %v441 = vadd.f32 0.0, %v440
    %v442 = vpop.f32.mrb[0].mxu0
    %v443 = vadd.f32 0.0, %v442
    %v444 = vpop.f32.mrb[0].mxu0
    %v445 = vadd.f32 0.0, %v444
    %446 = vmatprep.mubr.bf16.mxu0 0
    %447 = vmatmul.mubr.bf16.gmra.mrb[0].mxu0 %v290
    %v448 = vpop.f32.mrb[0].mxu0
    %v449 = vadd.f32 0.0, %v448
    %v450 = vpop.f32.mrb[0].mxu0
    %v451 = vadd.f32 0.0, %v450
    %v452 = vpop.f32.mrb[0].mxu0
    %v453 = vadd.f32 0.0, %v452
    %v454 = vpop.f32.mrb[0].mxu0
    %v455 = vadd.f32 0.0, %v454
    %456 = vmatprep.mubr.bf16.mxu0 0
    %457 = vmatmul.mubr.bf16.gmra.mrb[0].mxu0 %v293
    %v458 = vpop.f32.mrb[0].mxu0
    %v459 = vadd.f32 0.0, %v458
    %v460 = vpop.f32.mrb[0].mxu0
    %v461 = vadd.f32 0.0, %v460
    %v462 = vpop.f32.mrb[0].mxu0
    %v463 = vadd.f32 0.0, %v462
    %v464 = vpop.f32.mrb[0].mxu0
    %v465 = vadd.f32 0.0, %v464
    %466 = vmatprep.mubr.bf16.mxu0 0
    %467 = vmatmul.mubr.bf16.gmra.mrb[0].mxu0 %v296
    %v468 = vpop.f32.mrb[0].mxu0
    %v469 = vadd.f32 0.0, %v468
    %v470 = vpop.f32.mrb[0].mxu0
    %v471 = vadd.f32 0.0, %v470
    %v472 = vpop.f32.mrb[0].mxu0
    %v473 = vpop.f32.mrb[0].mxu0
    %474 = vdwg.mxu0
    %475 = vmatprep.subr.bf16.mxu0 0
    %476 = vmatpush1.bf16.xpose.msra.mxu0 %v347
    %477 = vmatprep.subr.bf16.mxu0 0
    %478 = vmatpush1.bf16.xpose.msra.mxu0 %v350
    %479 = vmatprep.subr.bf16.mxu0 0
    %480 = vmatpush1.bf16.xpose.msra.mxu0 %v353
    %481 = vmatprep.subr.bf16.mxu0 0
    %482 = vmatpush1.bf16.xpose.msra.mxu0 %v356
    %483 = vmatprep.subr.bf16.mxu0 0
    %484 = vmatpush1.bf16.xpose.msra.mxu0 %v359
    %485 = vmatprep.subr.bf16.mxu0 0
    %486 = vmatpush1.bf16.xpose.msra.mxu0 %v362
    %487 = vmatprep.subr.bf16.mxu0 0
    %488 = vmatpush1.bf16.xpose.msra.mxu0 %v365
    %489 = vmatprep.subr.bf16.mxu0 0
    %490 = vmatpush1.bf16.xpose.msra.mxu0 %v368
    %491 = vmatprep.subr.bf16.mxu0 0
    %492 = vmatpush1.bf16.xpose.msra.mxu0 %v371
    %493 = vmatprep.subr.bf16.mxu0 0
    %494 = vmatpush1.bf16.xpose.msra.mxu0 %v374
    %495 = vmatprep.subr.bf16.mxu0 0
    %496 = vmatpush1.bf16.xpose.msra.mxu0 %v377
    %497 = vmatprep.subr.bf16.mxu0 0
    %498 = vmatpush1.bf16.xpose.msra.mxu0 %v380
    %499 = vmatprep.subr.bf16.mxu0 0
    %500 = vmatpush1.bf16.xpose.msra.mxu0 %v383
    %501 = vmatprep.subr.bf16.mxu0 0
    %502 = vmatpush1.bf16.xpose.msra.mxu0 %v386
    %503 = vmatprep.subr.bf16.mxu0 0
    %504 = vmatpush1.bf16.xpose.msra.mxu0 %v389
    %505 = vmatprep.subr.bf16.mxu0 0
    %506 = vmatpush1.bf16.xpose.msra.mxu0 %v392
    %507 = vmatprep.mubr.bf16.mxu0 0
    %508 = vmatmul.mubr.bf16.gmra.mrb[0].mxu0 %v284
    %v509 = vpop.f32.mrb[0].mxu0
    %v510 = vadd.f32 0.0, %v509
    %v511 = vpop.f32.mrb[0].mxu0
    %v512 = vadd.f32 0.0, %v511
    %v513 = vpop.f32.mrb[0].mxu0
    %v514 = vadd.f32 0.0, %v513
    %v515 = vpop.f32.mrb[0].mxu0
    %v516 = vadd.f32 0.0, %v515
    %517 = vmatprep.mubr.bf16.mxu0 0
    %518 = vmatmul.mubr.bf16.gmra.mrb[0].mxu0 %v287
    %v519 = vpop.f32.mrb[0].mxu0
    %v520 = vadd.f32 0.0, %v519
    %v521 = vpop.f32.mrb[0].mxu0
    %v522 = vadd.f32 0.0, %v521
    %v523 = vpop.f32.mrb[0].mxu0
    %v524 = vadd.f32 0.0, %v523
    %v525 = vpop.f32.mrb[0].mxu0
    %v526 = vadd.f32 0.0, %v525
    %527 = vmatprep.mubr.bf16.mxu0 0
    %528 = vmatmul.mubr.bf16.gmra.mrb[0].mxu0 %v290
    %v529 = vpop.f32.mrb[0].mxu0
    %v530 = vadd.f32 0.0, %v529
    %v531 = vpop.f32.mrb[0].mxu0
    %v532 = vadd.f32 0.0, %v531
    %v533 = vpop.f32.mrb[0].mxu0
    %v534 = vadd.f32 0.0, %v533
    %v535 = vpop.f32.mrb[0].mxu0
    %v536 = vadd.f32 0.0, %v535
    %537 = vmatprep.mubr.bf16.mxu0 0
    %538 = vmatmul.mubr.bf16.gmra.mrb[0].mxu0 %v293
    %v539 = vpop.f32.mrb[0].mxu0
    %v540 = vadd.f32 0.0, %v539
    %v541 = vpop.f32.mrb[0].mxu0
    %v542 = vadd.f32 0.0, %v541
    %v543 = vpop.f32.mrb[0].mxu0
    %v544 = vadd.f32 0.0, %v543
    %v545 = vpop.f32.mrb[0].mxu0
    %v546 = vadd.f32 0.0, %v545
    %547 = vmatprep.mubr.bf16.mxu0 0
    %548 = vmatmul.mubr.bf16.gmra.mrb[0].mxu0 %v296
    %v549 = vpop.f32.mrb[0].mxu0
    %v550 = vadd.f32 0.0, %v549
    %v551 = vpop.f32.mrb[0].mxu0
    %v552 = vadd.f32 0.0, %v551
    %v553 = vpop.f32.mrb[0].mxu0
    %v554 = vpop.f32.mrb[0].mxu0
    %555 = vdwg.mxu0
    %v556 = vmax.f32 %v429, 0.0
    %v557 = vmax.f32 %v431, 0.0
    %v558 = vmax.f32 %v510, 0.0
    %v559 = vmax.f32 %v512, 0.0
    %v560 = vmax.f32 %v433, 0.0
    %v561 = vmax.f32 %v435, 0.0
    %v562 = vmax.f32 %v514, 0.0
    %v563 = vmax.f32 %v516, 0.0
    %v564 = vmax.f32 %v439, 0.0
    %v565 = vmax.f32 %v441, 0.0
    %v566 = vmax.f32 %v520, 0.0
    %v567 = vmax.f32 %v522, 0.0
    %v568 = vmax.f32 %v443, 0.0
    %v569 = vmax.f32 %v445, 0.0
    %v570 = vmax.f32 %v524, 0.0
    %v571 = vmax.f32 %v526, 0.0
    %v572 = vmax.f32 %v449, 0.0
    %v573 = vmax.f32 %v451, 0.0
    %v574 = vmax.f32 %v530, 0.0
    %v575 = vmax.f32 %v532, 0.0
    %v576 = vmax.f32 %v453, 0.0
    %v577 = vmax.f32 %v455, 0.0
    %v578 = vmax.f32 %v534, 0.0
    %v579 = vmax.f32 %v536, 0.0
    %v580 = vmax.f32 %v459, 0.0
    %v581 = vmax.f32 %v461, 0.0
    %v582 = vmax.f32 %v540, 0.0
    %v583 = vmax.f32 %v542, 0.0
    %v584 = vmax.f32 %v463, 0.0
    %v585 = vmax.f32 %v465, 0.0
    %v586 = vmax.f32 %v544, 0.0
    %v587 = vmax.f32 %v546, 0.0
    %v588 = vmax.f32 %v469, 0.0
    %v589 = vmax.f32 %v471, 0.0
    %v590 = vmax.f32 %v550, 0.0
    %v591 = vmax.f32 %v552, 0.0
    %v592 = vld [vmem:[%s2] sm:$0xff]
    %v593 = vld [vmem:[%s3] sm:$0xff]
    %595 = vset.pattern.permute.xlu0 0
    %596 = vperm.xlu0 %595, %v593
    %v597 = vpop.permute.xlu0 %596
    %vm599 = vcmask 588800
    %v601 = vsel %vm599, %v592, 0
    %603 = vmatprep.subr.mxu0 %v557
    %604 = vmatpush1.msra.mxu0 %v556
    %605 = vmatprep.subr.mxu0 %v561
    %606 = vmatpush1.msra.mxu0 %v560
    %607 = vmatprep.subr.mxu0 %v565
    %608 = vmatpush1.msra.mxu0 %v564
    %609 = vmatprep.subr.mxu0 %v569
    %610 = vmatpush1.msra.mxu0 %v568
    %611 = vmatprep.subr.mxu0 %v573
    %612 = vmatpush1.msra.mxu0 %v572
    %613 = vmatprep.subr.mxu0 %v577
    %614 = vmatpush1.msra.mxu0 %v576
    %615 = vmatprep.subr.mxu0 %v581
    %616 = vmatpush1.msra.mxu0 %v580
    %617 = vmatprep.subr.mxu0 %v585
    %618 = vmatpush1.msra.mxu0 %v584
    %619 = vmatprep.subr.mxu0 %v589
    %620 = vmatpush1.msra.mxu0 %v588
    %621 = vmatprep.subr.mxu0 0.0
    %622 = vmatpush1.msra.mxu0 0.0
    %623 = vmatprep.subr.mxu0 0.0
    %624 = vmatpush1.msra.mxu0 0.0
    %625 = vmatprep.subr.mxu0 0.0
    %626 = vmatpush1.msra.mxu0 0.0
    %627 = vmatprep.subr.mxu0 0.0
    %628 = vmatpush1.msra.mxu0 0.0
    %629 = vmatprep.subr.mxu0 0.0
    %630 = vmatpush1.msra.mxu0 0.0
    %631 = vmatprep.subr.mxu0 0.0
    %632 = vmatpush1.msra.mxu0 0.0
    %633 = vmatprep.subr.mxu0 0.0
    %634 = vmatpush1.msra.mxu0 0.0
    %635 = vmatprep.subr.mxu0 0.0
    %636 = vmatpush1.msra.mxu0 0.0
    %637 = vmatprep.subr.mxu0 0.0
    %638 = vmatpush1.msra.mxu0 0.0
    %639 = vmatprep.subr.mxu0 0.0
    %640 = vmatpush1.msra.mxu0 0.0
    %641 = vmatprep.subr.mxu0 0.0
    %642 = vmatpush1.msra.mxu0 0.0
    %643 = vmatprep.subr.mxu0 0.0
    %644 = vmatpush1.msra.mxu0 0.0
    %645 = vmatprep.subr.mxu0 0.0
    %646 = vmatpush1.msra.mxu0 0.0
    %647 = vmatprep.subr.mxu0 0.0
    %648 = vmatpush1.msra.mxu0 0.0
    %649 = vmatprep.subr.mxu0 0.0
    %650 = vmatpush1.msra.mxu0 0.0
    %651 = vmatprep.subr.mxu0 0.0
    %652 = vmatpush1.msra.mxu0 0.0
    %653 = vmatprep.subr.mxu0 0.0
    %654 = vmatpush1.msra.mxu0 0.0
    %655 = vmatprep.subr.mxu0 0.0
    %656 = vmatpush1.msra.mxu0 0.0
    %657 = vmatprep.subr.mxu0 0.0
    %658 = vmatpush1.msra.mxu0 0.0
    %659 = vmatprep.subr.mxu0 0.0
    %660 = vmatpush1.msra.mxu0 0.0
    %661 = vmatprep.subr.mxu0 0.0
    %662 = vmatpush1.msra.mxu0 0.0
    %663 = vmatprep.subr.mxu0 0.0
    %664 = vmatpush1.msra.mxu0 0.0
    %665 = vmatprep.subr.mxu0 0.0
    %666 = vmatpush1.msra.mxu0 0.0
    %667 = vmatprep.mubr.f32.mxu0 0.0
    %668 = vmatmul.mubr.f32.gmra.mrb[0].mxu0 %v601
    %v669 = vpop.f32.mrb[0].mxu0
    %v670 = vadd.f32 %v597, %v669
    %v671 = vpop.f32.mrb[0].mxu0
    %v672 = vadd.f32 %v597, %v671
    %673 = vdwg.mxu0
    %674 = vmatprep.subr.mxu0 %v559
    %675 = vmatpush1.msra.mxu0 %v558
    %676 = vmatprep.subr.mxu0 %v563
    %677 = vmatpush1.msra.mxu0 %v562
    %678 = vmatprep.subr.mxu0 %v567
    %679 = vmatpush1.msra.mxu0 %v566
    %680 = vmatprep.subr.mxu0 %v571
    %681 = vmatpush1.msra.mxu0 %v570
    %682 = vmatprep.subr.mxu0 %v575
    %683 = vmatpush1.msra.mxu0 %v574
    %684 = vmatprep.subr.mxu0 %v579
    %685 = vmatpush1.msra.mxu0 %v578
    %686 = vmatprep.subr.mxu0 %v583
    %687 = vmatpush1.msra.mxu0 %v582
    %688 = vmatprep.subr.mxu0 %v587
    %689 = vmatpush1.msra.mxu0 %v586
    %690 = vmatprep.subr.mxu0 %v591
    %691 = vmatpush1.msra.mxu0 %v590
    %692 = vmatprep.subr.mxu0 0.0
    %693 = vmatpush1.msra.mxu0 0.0
    %694 = vmatprep.subr.mxu0 0.0
    %695 = vmatpush1.msra.mxu0 0.0
    %696 = vmatprep.subr.mxu0 0.0
    %697 = vmatpush1.msra.mxu0 0.0
    %698 = vmatprep.subr.mxu0 0.0
    %699 = vmatpush1.msra.mxu0 0.0
    %700 = vmatprep.subr.mxu0 0.0
    %701 = vmatpush1.msra.mxu0 0.0
    %702 = vmatprep.subr.mxu0 0.0
    %703 = vmatpush1.msra.mxu0 0.0
    %704 = vmatprep.subr.mxu0 0.0
    %705 = vmatpush1.msra.mxu0 0.0
    %706 = vmatprep.subr.mxu0 0.0
    %707 = vmatpush1.msra.mxu0 0.0
    %708 = vmatprep.subr.mxu0 0.0
    %709 = vmatpush1.msra.mxu0 0.0
    %710 = vmatprep.subr.mxu0 0.0
    %711 = vmatpush1.msra.mxu0 0.0
    %712 = vmatprep.subr.mxu0 0.0
    %713 = vmatpush1.msra.mxu0 0.0
    %714 = vmatprep.subr.mxu0 0.0
    %715 = vmatpush1.msra.mxu0 0.0
    %716 = vmatprep.subr.mxu0 0.0
    %717 = vmatpush1.msra.mxu0 0.0
    %718 = vmatprep.subr.mxu0 0.0
    %719 = vmatpush1.msra.mxu0 0.0
    %720 = vmatprep.subr.mxu0 0.0
    %721 = vmatpush1.msra.mxu0 0.0
    %722 = vmatprep.subr.mxu0 0.0
    %723 = vmatpush1.msra.mxu0 0.0
    %724 = vmatprep.subr.mxu0 0.0
    %725 = vmatpush1.msra.mxu0 0.0
    %726 = vmatprep.subr.mxu0 0.0
    %727 = vmatpush1.msra.mxu0 0.0
    %728 = vmatprep.subr.mxu0 0.0
    %729 = vmatpush1.msra.mxu0 0.0
    %730 = vmatprep.subr.mxu0 0.0
    %731 = vmatpush1.msra.mxu0 0.0
    %732 = vmatprep.subr.mxu0 0.0
    %733 = vmatpush1.msra.mxu0 0.0
    %734 = vmatprep.subr.mxu0 0.0
    %735 = vmatpush1.msra.mxu0 0.0
    %736 = vmatprep.subr.mxu0 0.0
    %737 = vmatpush1.msra.mxu0 0.0
    %738 = vmatprep.mubr.f32.mxu0 0.0
    %739 = vmatmul.mubr.f32.gmra.mrb[0].mxu0 %v601
    %v740 = vpop.f32.mrb[0].mxu0
    %v741 = vadd.f32 %v597, %v740
    %v742 = vpop.f32.mrb[0].mxu0
    %v743 = vadd.f32 %v597, %v742
    %744 = vdwg.mxu0
    %v745 = vmax.f32 %v670, 0.0
    %v746 = vmax.f32 %v672, 0.0
    %v747 = vmax.f32 %v741, 0.0
    %v748 = vmax.f32 %v743, 0.0
    %v749 = vld [vmem:[%s4] sm:$0xff]
    %751 = vset.pattern.permute.xlu0 0
    %752 = vperm.xlu0 %751, %v749
    %v753 = vpop.permute.xlu0 %752
    %v755 = vmul.f32 %v745, %v753
    %v756 = vmul.f32 %v746, %v753
    %v757 = vmul.f32 %v747, %v753
    %v758 = vmul.f32 %v748, %v753
    %v759 = vrot.slane %v755, 4
    %v760 = vadd.f32 %v755, %v759
    %v761 = vrot.slane %v760, 2
    %v762 = vadd.f32 %v760, %v761
    %v763 = vrot.slane %v762, 1
    %v764 = vadd.f32 %v762, %v763
    %v765 = vrot.slane %v756, 4
    %v766 = vadd.f32 %v756, %v765
    %v767 = vrot.slane %v766, 2
    %v768 = vadd.f32 %v766, %v767
    %v769 = vrot.slane %v768, 1
    %v770 = vadd.f32 %v768, %v769
    %v771 = vrot.slane %v757, 4
    %v772 = vadd.f32 %v757, %v771
    %v773 = vrot.slane %v772, 2
    %v774 = vadd.f32 %v772, %v773
    %v775 = vrot.slane %v774, 1
    %v776 = vadd.f32 %v774, %v775
    %v777 = vrot.slane %v758, 4
    %v778 = vadd.f32 %v758, %v777
    %v779 = vrot.slane %v778, 2
    %v780 = vadd.f32 %v778, %v779
    %v781 = vrot.slane %v780, 1
    %v782 = vadd.f32 %v780, %v781
    %s783 = sld [smem:[#allocation2]]
    %v784 = vstv %s783
    %v785 = vadd.f32 %v764, %v784
    %v786 = vadd.f32 %v770, %v784
    %v787 = vadd.f32 %v776, %v784
    %v788 = vadd.f32 %v782, %v784
    %v793 = vcombine.low %v785, %v786
    %v794 = vcombine.low %v787, %v788
    %v796 = vunpack.c.l.s4 1966171168
    %v797 = vunpack.c.0.s8 %v796
    %v798 = vlaneseq
    %v799 = vshrl.u32 %v798, 7
    %v800 = vsub.s32 %v797, %v799
    %v801 = vrot.slane %v793, %v800
    %v803 = vunpack.c.l.s4 1966171168
    %v804 = vunpack.c.0.s8 %v803
    %v805 = vlaneseq
    %v806 = vshrl.u32 %v805, 7
    %v807 = vsub.s32 %v804, %v806
    %v808 = vrot.slane %v794, %v807
    %v809 = vcombine.low %v801, %v808
    %v811 = vunpack.c.l.s4 1966171168
    %v812 = vunpack.c.0.s8 %v811
    %v813 = vlaneseq
    %v814 = vshrl.u32 %v813, 7
    %v815 = vsub.s32 %v812, %v814
    %v816 = vrot.slane %v809, %v815
    %v818 = vlaneseq
    %vm819 = vcmp.ge.s32.totalorder %v818, 0
    %vm820 = vcmp.lt.s32.totalorder %v818, 512
    %vm821 = vmand %vm819, %vm820
    %822 = vst.msk [vmem:[#allocation3] sm:$0xf] %vm821, %v816
    // Predicated region
    $region26: #{tpu_custom_call.1} parent=1 // pred_check
      _
    $region27: #{tpu_custom_call.1} parent=1 // pred_check_branch
      %824 = sbr.rel (0) target = $region29
    $region28: #{tpu_custom_call.1} parent=1 // pred_region
      %s826 = ssub.s32 64, 64
      %827 = vsyncadd [#allocation4], %s826
      %s829 = sshll.u32 [#allocation3], 4
      %s830 = int_to_ptr.vmem [resolvable:$true] %s829
      %832 = dma.vmem_to_hbm [thread:$0]  %s830, 64, %s6, [#allocation4]
    $region29: #{tpu_custom_call.1} parent=1 // pred_fallthru
      _
    // Predicated region
    $region30: #{tpu_custom_call.1} parent=1 // pred_check
      _
    $region31: #{tpu_custom_call.1} parent=1 // pred_check_branch
      %834 = sbr.rel (0) target = $region33
    $region32: #{tpu_custom_call.1} parent=1 // pred_region
      %835 = dma.done [#allocation4], 64
    $region33: #{tpu_custom_call.1} parent=1 // pred_fallthru
      _
    %836 = vsyncpa [#allocation4], 1

</llo_original>
